<compile_context>
chip_gen: v5e
topology: v5e:2x2
jax: 0.10.0
libtpu: 0.0.40
codegen_flags: <defaults>
</compile_context>

<pallas_src>
import jax
import jax.numpy as jnp
from jax import lax
from jax.experimental import pallas as pl
from jax.experimental.pallas import tpu as pltpu

IN_F = 10
HID_F = 20
OUT_F = 10
LANE = 128        # lane width; batch tiles are multiples of this
CHUNK = 512       # in-kernel sub-chunk (keeps live vregs ~25, no spills)
MAX_TB = 32768    # max lanes per grid step (~1.3 MB x+y per step in bf16)


def _round_up(x, m):
    return (x + m - 1) // m * m


def _choose_tiling(batch):
    """Pick (n_tiles, tile_lanes, padded_lanes) for a given batch size."""
    b_lane = _round_up(max(batch, 1), LANE)
    if b_lane < 2 * LANE:
        # Too small to split usefully: one 128-lane tile, one chunk.
        return 1, b_lane, b_lane
    n = pl.cdiv(b_lane, MAX_TB)
    n = max(n, 2)  # v7x has 2 TensorCores: keep >=2 "parallel" tiles.
    tb = _round_up(pl.cdiv(b_lane, n), LANE)
    if tb > CHUNK:
        tb = _round_up(tb, CHUNK)  # so the tile divides into 512-lane chunks
    return n, tb, n * tb


def mlp_encoder_kernel(x_ref, w1_ref, b1_ref, w2_ref, b2_ref, o_ref):
    # Activations are (features, batch_tile): batch on lanes.
    tb = o_ref.shape[1]
    chunk = min(CHUNK, tb)          # static at trace time
    n_chunks = tb // chunk          # static at trace time

    # Weights/biases loaded once per grid step (tiny, VMEM resident).
    w1 = w1_ref[...]                # (20, 10) bf16
    b1 = b1_ref[...]                # (20, 1)  f32
    w2 = w2_ref[...]                # (10, 20) bf16
    b2 = b2_ref[...]                # (10, 1)  f32

    def body(c, carry):
        off = pl.multiple_of(c * chunk, chunk)
        x = x_ref[:, pl.ds(off, chunk)]                                   # (10, chunk) bf16
        h = jnp.dot(w1, x, preferred_element_type=jnp.float32)            # (20, chunk) f32
        h = jnp.maximum(h + b1, 0.0)                                      # bias + ReLU
        y = jnp.dot(w2, h.astype(jnp.bfloat16),
                    preferred_element_type=jnp.float32)                   # (10, chunk) f32
        y = jnp.maximum(y + b2, 0.0)
        o_ref[:, pl.ds(off, chunk)] = y.astype(o_ref.dtype)
        return carry

    lax.fori_loop(0, n_chunks, body, 0, unroll=True)


def _mlp_forward_fm(x_t, w1_bf, b1_2d, w2_bf, b2_2d, n_tiles, tb):
    """Core pallas_call on feature-major, padded, bf16 activations."""
    b_pad = x_t.shape[1]
    flops = 2 * b_pad * (IN_F * HID_F + HID_F * OUT_F)
    bytes_accessed = (x_t.size * 2 + b_pad * OUT_F * 2          # bf16 in / bf16 out
                      + w1_bf.size * 2 + w2_bf.size * 2
                      + b1_2d.size * 4 + b2_2d.size * 4)

    return pl.pallas_call(
        mlp_encoder_kernel,
        out_shape=jax.ShapeDtypeStruct((OUT_F, b_pad), jnp.bfloat16),
        grid_spec=pl.GridSpec(
            grid=(n_tiles,),
            in_specs=[
                pl.BlockSpec((IN_F, tb), lambda i: (0, i)),      # x^T tile (streamed)
                pl.BlockSpec((HID_F, IN_F), lambda i: (0, 0)),   # W1 (resident)
                pl.BlockSpec((HID_F, 1), lambda i: (0, 0)),      # b1 (resident)
                pl.BlockSpec((OUT_F, HID_F), lambda i: (0, 0)),  # W2 (resident)
                pl.BlockSpec((OUT_F, 1), lambda i: (0, 0)),      # b2 (resident)
            ],
            out_specs=pl.BlockSpec((OUT_F, tb), lambda i: (0, i)),
        ),
        compiler_params=pltpu.CompilerParams(
            dimension_semantics=("parallel",)),
        cost_estimate=pl.CostEstimate(
            flops=flops, transcendentals=0, bytes_accessed=bytes_accessed),
    )(x_t, w1_bf, b1_2d, w2_bf, b2_2d)


def mlp_encoder_fm(x_t, w1, b1, w2, b2):
    """Feature-major fast path (no wrapper transpose passes).

    x_t: (10, B_lanes) bf16, B_lanes a multiple of 128 (padded columns are
    garbage in the output, not zeros). Returns (10, B_lanes) bf16.
    """
    b_in = x_t.shape[1]
    n_tiles, tb, b_pad = _choose_tiling(b_in)
    if b_pad != b_in:
        x_t = jnp.pad(x_t, ((0, 0), (0, b_pad - b_in)))
    out_t = _mlp_forward_fm(x_t.astype(jnp.bfloat16),
                            w1.astype(jnp.bfloat16),
                            b1.reshape(HID_F, 1).astype(jnp.float32),
                            w2.astype(jnp.bfloat16),
                            b2.reshape(OUT_F, 1).astype(jnp.float32),
                            n_tiles, tb)
    return out_t if b_pad == b_in else out_t[:, :b_in]


def mlp_encoder(x, w1, b1, w2, b2):
    """PyTorch-equivalent interface.

    x: (B, 10) f32; w1: (20, 10); b1: (20,); w2: (10, 20); b2: (10,)
    (nn.Linear layout: (out_features, in_features)). Returns (B, 10) f32.
    Note: matmul operands and the kernel output are bf16 (f32 accumulation).
    """
    B = x.shape[0]
    n_tiles, tb, b_pad = _choose_tiling(B)

    # Feature-major, bf16 operands; zero-pad batch up to the tile grid.
    x_t = jnp.zeros((IN_F, b_pad), jnp.bfloat16).at[:, :B].set(
        x.T.astype(jnp.bfloat16))
    out_t = _mlp_forward_fm(x_t,
                            w1.astype(jnp.bfloat16),
                            b1.reshape(HID_F, 1).astype(jnp.float32),
                            w2.astype(jnp.bfloat16),
                            b2.reshape(OUT_F, 1).astype(jnp.float32),
                            n_tiles, tb)
    # Drop batch padding, back to (B, 10) f32.
    return out_t[:, :B].T.astype(jnp.float32)


def reference_bf16(x, w1, b1, w2, b2):
    """Reference with the same bf16 quantization of matmul operands as the kernel."""
    xb = x.astype(jnp.bfloat16).astype(jnp.float32)
    w1b = w1.astype(jnp.bfloat16).astype(jnp.float32)
    w2b = w2.astype(jnp.bfloat16).astype(jnp.float32)
    h = jnp.maximum(xb @ w1b.T + b1, 0.0)
    hb = h.astype(jnp.bfloat16).astype(jnp.float32)
    return jnp.maximum(hb @ w2b.T + b2, 0.0)


def reference_f32(x, w1, b1, w2, b2):
    h = jnp.maximum(x @ w1.T + b1, 0.0)
    return jnp.maximum(h @ w2.T + b2, 0.0)


def init_params(key):
    # Mimics nn.Linear default init: uniform(-1/sqrt(fan_in), +1/sqrt(fan_in)).
    k1, k2, k3, k4 = jax.random.split(key, 4)
    bound1 = 1.0 / jnp.sqrt(float(IN_F))
    bound2 = 1.0 / jnp.sqrt(float(HID_F))
    w1 = jax.random.uniform(k1, (HID_F, IN_F), jnp.float32, -bound1, bound1)
    b1 = jax.random.uniform(k2, (HID_F,), jnp.float32, -bound1, bound1)
    w2 = jax.random.uniform(k3, (OUT_F, HID_F), jnp.float32, -bound2, bound2)
    b2 = jax.random.uniform(k4, (OUT_F,), jnp.float32, -bound2, bound2)
    return w1, b1, w2, b2


if __name__ == "__main__":
    key = jax.random.PRNGKey(0)
    kx, kp = jax.random.split(key)
    w1, b1, w2, b2 = init_params(kp)

    # Small-shape check (single 128-lane tile after padding).
    batch = 8
    x = jax.random.normal(kx, (batch, IN_F), jnp.float32)
    out = jax.block_until_ready(mlp_encoder(x, w1, b1, w2, b2))
    assert out.shape == (batch, OUT_F)
    # bf16 output => compare at bf16-level tolerance.
    assert jnp.allclose(out, reference_bf16(x, w1, b1, w2, b2),
                        atol=2e-2, rtol=2e-2), "mismatch vs bf16 reference"
    assert jnp.allclose(out, reference_f32(x, w1, b1, w2, b2),
                        atol=5e-2, rtol=5e-2), "mismatch vs f32 reference"

    # Multi-tile check (exercises grid=2 across TensorCores + batch padding).
    batch2 = 1000
    x2 = jax.random.normal(jax.random.PRNGKey(1), (batch2, IN_F), jnp.float32)
    out2 = jax.block_until_ready(mlp_encoder(x2, w1, b1, w2, b2))
    assert out2.shape == (batch2, OUT_F)
    assert jnp.allclose(out2, reference_bf16(x2, w1, b1, w2, b2),
                        atol=2e-2, rtol=2e-2), "multi-tile mismatch"

    # Feature-major fast-path check (no wrapper transpose passes).
    b_lanes = 1024
    x3_t = jnp.zeros((IN_F, b_lanes), jnp.bfloat16).at[:, :batch2].set(
        x2.T.astype(jnp.bfloat16))
    out3_t = jax.block_until_ready(mlp_encoder_fm(x3_t, w1, b1, w2, b2))
    assert out3_t.shape == (OUT_F, b_lanes)
    assert jnp.allclose(out3_t[:, :batch2].T.astype(jnp.float32), out2,
                        atol=2e-2, rtol=2e-2), "feature-major path mismatch"

    print("KERNEL_OK")
</pallas_src>

<mosaic_0001>
module attributes {stable_mosaic.version = 11 : i64} {
  func.func @mlp_encoder_kernel(%arg0: i32, %arg1: memref<10x128xbf16, #tpu.memory_space<vmem>>, %arg2: memref<20x10xbf16, #tpu.memory_space<vmem>>, %arg3: memref<20x1xf32, #tpu.memory_space<vmem>>, %arg4: memref<10x20xbf16, #tpu.memory_space<vmem>>, %arg5: memref<10x1xf32, #tpu.memory_space<vmem>>, %arg6: memref<10x128xbf16, #tpu.memory_space<vmem>>) attributes {dimension_semantics = [#tpu.dimension_semantics<parallel>], iteration_bounds = array<i64: 1>, scalar_prefetch = 0 : i64, scratch_operands = 0 : i64, tpu.core_type = #tpu.core_type<tc>, window_params = [{transform_indices = @transform_0, window_bounds = array<i64: 10, 128>}, {pipeline_mode = #tpu.pipeline_mode<synchronous>, transform_indices = @transform_1, window_bounds = array<i64: 20, 10>}, {pipeline_mode = #tpu.pipeline_mode<synchronous>, transform_indices = @transform_2, window_bounds = array<i64: 20, 1>}, {pipeline_mode = #tpu.pipeline_mode<synchronous>, transform_indices = @transform_3, window_bounds = array<i64: 10, 20>}, {pipeline_mode = #tpu.pipeline_mode<synchronous>, transform_indices = @transform_4, window_bounds = array<i64: 10, 1>}, {transform_indices = @transform_5, window_bounds = array<i64: 10, 128>}]} {
    %c0 = arith.constant 0 : index
    %c0_0 = arith.constant 0 : index
    %0 = vector.load %arg2[%c0, %c0_0] : memref<20x10xbf16, #tpu.memory_space<vmem>>, vector<20x10xbf16>
    %c0_1 = arith.constant 0 : index
    %c0_2 = arith.constant 0 : index
    %1 = vector.load %arg3[%c0_1, %c0_2] : memref<20x1xf32, #tpu.memory_space<vmem>>, vector<20x1xf32>
    %c0_3 = arith.constant 0 : index
    %c0_4 = arith.constant 0 : index
    %2 = vector.load %arg4[%c0_3, %c0_4] : memref<10x20xbf16, #tpu.memory_space<vmem>>, vector<10x20xbf16>
    %c0_5 = arith.constant 0 : index
    %c0_6 = arith.constant 0 : index
    %3 = vector.load %arg5[%c0_5, %c0_6] : memref<10x1xf32, #tpu.memory_space<vmem>>, vector<10x1xf32>
    %c0_i32 = arith.constant 0 : i32
    %c128_i32 = arith.constant 128 : i32
    %4 = arith.muli %c0_i32, %c128_i32 : i32
    %5 = tpu.assume_multiple %4, 128 : i32
    %c0_7 = arith.constant 0 : index
    %6 = arith.index_cast %5 : i32 to index
    %7 = vector.load %arg1[%c0_7, %6] : memref<10x128xbf16, #tpu.memory_space<vmem>>, vector<10x128xbf16>
    %cst = arith.constant dense<0.000000e+00> : vector<20x128xf32>
    %8 = tpu.matmul %0, %7, %cst {dimension_numbers = #tpu.dot_dimension_numbers<[1], [0], [0], [1], [0, 0, 1, 1], [], []>} : vector<20x10xbf16>, vector<10x128xbf16>, vector<20x128xf32> -> vector<20x128xf32>
    %9 = vector.broadcast %1 : vector<20x1xf32> to vector<20x128xf32>
    %10 = arith.addf %8, %9 : vector<20x128xf32>
    %cst_8 = arith.constant 0.000000e+00 : f32
    %11 = vector.broadcast %cst_8 : f32 to vector<20x128xf32>
    %12 = arith.maximumf %10, %11 : vector<20x128xf32>
    %13 = arith.truncf %12 : vector<20x128xf32> to vector<20x128xbf16>
    %cst_9 = arith.constant dense<0.000000e+00> : vector<10x128xf32>
    %14 = tpu.matmul %2, %13, %cst_9 {dimension_numbers = #tpu.dot_dimension_numbers<[1], [0], [0], [1], [0, 0, 1, 1], [], []>} : vector<10x20xbf16>, vector<20x128xbf16>, vector<10x128xf32> -> vector<10x128xf32>
    %15 = vector.broadcast %3 : vector<10x1xf32> to vector<10x128xf32>
    %16 = arith.addf %14, %15 : vector<10x128xf32>
    %cst_10 = arith.constant 0.000000e+00 : f32
    %17 = vector.broadcast %cst_10 : f32 to vector<10x128xf32>
    %18 = arith.maximumf %16, %17 : vector<10x128xf32>
    %19 = arith.truncf %18 : vector<10x128xf32> to vector<10x128xbf16>
    %c0_11 = arith.constant 0 : index
    %20 = arith.index_cast %5 : i32 to index
    %21 = vector.load %arg6[%c0_11, %20] : memref<10x128xbf16, #tpu.memory_space<vmem>>, vector<10x128xbf16>
    tpu.vector_store %arg6[%c0_11, %20], %19 {strides = array<i32>} : memref<10x128xbf16, #tpu.memory_space<vmem>>, vector<10x128xbf16>,
    %c1_i32 = arith.constant 1 : i32
    return
  }
  func.func @transform_0(%arg0: i32) -> (i32, i32) {
    %c0_i32 = arith.constant 0 : i32
    %c0_i32_0 = arith.constant 0 : i32
    return %c0_i32, %arg0 : i32, i32
  }
  func.func @transform_1(%arg0: i32) -> (i32, i32) {
    %c0_i32 = arith.constant 0 : i32
    %c0_i32_0 = arith.constant 0 : i32
    %c0_i32_1 = arith.constant 0 : i32
    return %c0_i32, %c0_i32_0 : i32, i32
  }
  func.func @transform_2(%arg0: i32) -> (i32, i32) {
    %c0_i32 = arith.constant 0 : i32
    %c0_i32_0 = arith.constant 0 : i32
    %c0_i32_1 = arith.constant 0 : i32
    return %c0_i32, %c0_i32_0 : i32, i32
  }
  func.func @transform_3(%arg0: i32) -> (i32, i32) {
    %c0_i32 = arith.constant 0 : i32
    %c0_i32_0 = arith.constant 0 : i32
    %c0_i32_1 = arith.constant 0 : i32
    return %c0_i32, %c0_i32_0 : i32, i32
  }
  func.func @transform_4(%arg0: i32) -> (i32, i32) {
    %c0_i32 = arith.constant 0 : i32
    %c0_i32_0 = arith.constant 0 : i32
    %c0_i32_1 = arith.constant 0 : i32
    return %c0_i32, %c0_i32_0 : i32, i32
  }
  func.func @transform_5(%arg0: i32) -> (i32, i32) {
    %c0_i32 = arith.constant 0 : i32
    %c0_i32_0 = arith.constant 0 : i32
    return %c0_i32, %arg0 : i32, i32
  }
}

</mosaic_0001>

<llo_original>
// kernel: tpu_custom_call.1
$region0: #{tpu_custom_call.1}
  #allocation0 [shape = 'u32[]', space=smem, size = 0x4, offset = 0x4, fixed_abs, tag = 'smem constant byte address 0x4 - core index']
  #allocation1 [shape = 'u32[72,128]{1,0:T(1,128)}', space=vmem, size = 0x9000, scoped, tag = 'internal scratch']
  %s0 = inlined_call_operand.vmem [shape: bf16[10,128], index: 0, kind: input, shape index: {}]
  %s1 = inlined_call_operand.vmem [shape: bf16[20,10], index: 1, kind: input, shape index: {}]
  %s2 = inlined_call_operand.vmem [shape: f32[20,1], index: 2, kind: input, shape index: {}]
  %s3 = inlined_call_operand.vmem [shape: bf16[10,20], index: 3, kind: input, shape index: {}]
  %s4 = inlined_call_operand.vmem [shape: f32[10,1], index: 4, kind: input, shape index: {}]
  %s5 = inlined_call_operand.hbm [shape: bf16[10,128], index: 5, kind: output, shape index: {}]
  %s6 = sld [smem:[#allocation0]]
  $region30: #{tpu_custom_call.1} parent=0
    _
  %s8 = ssub.s32 1, %s6
  %s9 = scalar_select 0, %s8, %s6
  $region1: #{tpu_custom_call.1} parent=0
    #allocation2 [shape = 'u8[4096]{0}', space=vmem, size = 0x1000, scoped, tag = 'output window, operand 0, single buffered']
    #allocation3 [shape = 's32[1]{0}', space=sflag, size = 0x4, scoped, tag = 'scoped memory for tpu_custom_call.1']
    %10 = vsyncpa [#allocation3], 0
    // Predicated region
    $region2: #{tpu_custom_call.1} parent=1 // pred_check
      _
    $region3: #{tpu_custom_call.1} parent=1 // pred_check_branch
      %12 = sbr.rel (0) target = $region5
    $region4: #{tpu_custom_call.1} parent=1 // pred_region
      _
    $region5: #{tpu_custom_call.1} parent=1 // pred_fallthru
      _
    // Predicated region
    $region6: #{tpu_custom_call.1} parent=1 // pred_check
      _
    $region7: #{tpu_custom_call.1} parent=1 // pred_check_branch
      %14 = sbr.rel (0) target = $region9
    $region8: #{tpu_custom_call.1} parent=1 // pred_region
      _
    $region9: #{tpu_custom_call.1} parent=1 // pred_fallthru
      _
    // Predicated region
    $region10: #{tpu_custom_call.1} parent=1 // pred_check
      _
    $region11: #{tpu_custom_call.1} parent=1 // pred_check_branch
      %16 = sbr.rel (0) target = $region13
    $region12: #{tpu_custom_call.1} parent=1 // pred_region
      _
    $region13: #{tpu_custom_call.1} parent=1 // pred_fallthru
      _
    // Predicated region
    $region14: #{tpu_custom_call.1} parent=1 // pred_check
      _
    $region15: #{tpu_custom_call.1} parent=1 // pred_check_branch
      %18 = sbr.rel (0) target = $region17
    $region16: #{tpu_custom_call.1} parent=1 // pred_region
      _
    $region17: #{tpu_custom_call.1} parent=1 // pred_fallthru
      _
    // Predicated region
    $region18: #{tpu_custom_call.1} parent=1 // pred_check
      _
    $region19: #{tpu_custom_call.1} parent=1 // pred_check_branch
      %20 = sbr.rel (0) target = $region21
    $region20: #{tpu_custom_call.1} parent=1 // pred_region
      _
    $region21: #{tpu_custom_call.1} parent=1 // pred_fallthru
      _
    %v22 = vld [vmem:[%s1] sm:$0xf]
    %v23 = vld [vmem:[%s1 + $0x4] sm:$0xf]
    %v24 = vld [vmem:[%s1 + $0x8] sm:$0x3]
    %v25 = vld [vmem:[%s2] sm:$0xff]
    %v26 = vld [vmem:[%s2 + $0x8] sm:$0xff]
    %v27 = vld [vmem:[%s2 + $0x10] sm:$0xf]
    %v28 = vld [vmem:[%s3] sm:$0xf]
    %v29 = vld [vmem:[%s3 + $0x4] sm:$0x1]
    %v30 = vld [vmem:[%s4] sm:$0xff]
    %v31 = vld [vmem:[%s4 + $0x8] sm:$0x3]
    %v32 = vld [vmem:[%s0] sm:$0xf]
    %v33 = vld [vmem:[%s0 + $0x4] sm:$0x1]
    %35 = vset.pattern.permute.xlu0 0
    %36 = vperm.xlu0 %35, %v25
    %v37 = vpop.permute.xlu0 %36
    %40 = vset.pattern.permute.xlu0 0
    %41 = vperm.xlu0 %40, %v26
    %v42 = vpop.permute.xlu0 %41
    %45 = vset.pattern.permute.xlu0 0
    %46 = vperm.xlu0 %45, %v27
    %v47 = vpop.permute.xlu0 %46
    %v52 = vunpack.c.l.b16 %v22
    %v53 = vunpack.c.l.b16 %v23
    %v54 = vunpack.c.l.b16 %v24
    %v55 = vpack.c.b16 %v53, %v52
    %v56 = vpack.c.b16 %v54, %v54
    %v59 = vunpack.c.l.b16 %v32
    %v60 = vunpack.c.l.b16 %v33
    %v61 = vpack.c.b16 %v60, %v59
    %vm62 = vcmask 80896
    %v64 = vsel %vm62, %v55, 0
    %v67 = vsel %vm62, %v56, 0
    %vm69 = vcmask 1044480
    %v71 = vsel %vm69, %v61, 0
    %73 = vmatpush.bf16.msra.mxu0 0
    %74 = vmatpush.bf16.msra.mxu0 0
    %75 = vmatpush.bf16.msra.mxu0 0
    %76 = vmatpush.bf16.msra.mxu0 0
    %77 = vmatpush.bf16.msra.mxu0 0
    %78 = vmatpush.bf16.msra.mxu0 0
    %79 = vmatpush.bf16.msra.mxu0 0
    %80 = vmatpush.bf16.msra.mxu0 %v71
    %81 = vmatmul.bf16.gmra.mxu0 %v64
    %v82 = vpop.f32.mrf.mxu0
    %v83 = vadd.f32 %v37, %v82
    %v84 = vpop.f32.mrf.mxu0
    %v85 = vadd.f32 %v42, %v84
    %86 = vmatmul.bf16.gmra.mxu0 %v67
    %v87 = vpop.f32.mrf.mxu0
    %v88 = vadd.f32 %v47, %v87
    %v89 = vpop.f32.mrf.mxu0
    %90 = vdwg.mxu0
    %v91 = vmax.f32 %v83, 0.0
    %v92 = vmax.f32 %v85, 0.0
    %v93 = vmax.f32 %v88, 0.0
    %v94 = vpack.c.bf16 %v92, %v91
    %v95 = vpack.c.bf16 %v93, %v93
    %97 = vset.pattern.permute.xlu0 0
    %98 = vperm.xlu0 %97, %v30
    %v99 = vpop.permute.xlu0 %98
    %102 = vset.pattern.permute.xlu0 0
    %103 = vperm.xlu0 %102, %v31
    %v104 = vpop.permute.xlu0 %103
    %v108 = vunpack.c.l.b16 %v28
    %v109 = vunpack.c.l.b16 %v29
    %v110 = vpack.c.b16 %v109, %v108
    %vm111 = vcmask 162816
    %v113 = vsel %vm111, %v110, 0
    %vm115 = vcmask 1041408
    %v117 = vsel %vm115, %v95, 0
    %119 = vmatpush.bf16.msra.mxu0 0
    %120 = vmatpush.bf16.msra.mxu0 0
    %121 = vmatpush.bf16.msra.mxu0 0
    %122 = vmatpush.bf16.msra.mxu0 0
    %123 = vmatpush.bf16.msra.mxu0 0
    %124 = vmatpush.bf16.msra.mxu0 0
    %125 = vmatpush.bf16.msra.mxu0 %v117
    %126 = vmatpush.bf16.msra.mxu0 %v94
    %127 = vmatmul.bf16.gmra.mxu0 %v113
    %v128 = vpop.f32.mrf.mxu0
    %v129 = vadd.f32 %v99, %v128
    %v130 = vpop.f32.mrf.mxu0
    %v131 = vadd.f32 %v104, %v130
    %132 = vdwg.mxu0
    %v133 = vmax.f32 %v129, 0.0
    %v134 = vmax.f32 %v131, 0.0
    %v135 = vpack.c.bf16 %v133, %v133
    %v136 = vpack.c.bf16 %v134, %v134
    %137 = vst [vmem:[#allocation2] sm:$0xf] %v135
    %138 = vst [vmem:[#allocation2 + $0x4] sm:$0x1] %v136
    // Predicated region
    $region22: #{tpu_custom_call.1} parent=1 // pred_check
      _
    $region23: #{tpu_custom_call.1} parent=1 // pred_check_branch
      %140 = sbr.rel (0) target = $region25
    $region24: #{tpu_custom_call.1} parent=1 // pred_region
      %142 = vsyncadd [#allocation3], 0
      %s143 = sshll.u32 [#allocation2], 4
      %s144 = int_to_ptr.vmem [resolvable:$true] %s143
      %s145 = sshll.u32 %s5, 4
      %s146 = int_to_ptr.hbm [resolvable:$true] %s145
      %151 = dma.vmem_to_hbm [thread:$0]  %s144, 128, %s146, [#allocation3], 64, 64, 4
    $region25: #{tpu_custom_call.1} parent=1 // pred_fallthru
      _
    // Predicated region
    $region26: #{tpu_custom_call.1} parent=1 // pred_check
      _
    $region27: #{tpu_custom_call.1} parent=1 // pred_check_branch
      %153 = sbr.rel (0) target = $region29
    $region28: #{tpu_custom_call.1} parent=1 // pred_region
      %155 = dma.done [#allocation3], 128
    $region29: #{tpu_custom_call.1} parent=1 // pred_fallthru
      _
    %156 = vsyncpa [#allocation3], 1

</llo_original>
